<compile_context>
chip_gen: v7x
topology: tpu7x:2x2x1
jax: 0.10.0
libtpu: 0.0.40
codegen_flags: <defaults>
</compile_context>

<pallas_src>
import functools
import math

import jax
import jax.numpy as jnp
from jax.experimental import pallas as pl
from jax.experimental.pallas import tpu as pltpu


def _round_up(n: int, m: int) -> int:
    return ((n + m - 1) // m) * m


# ---------------------------------------------------------------------------
# Fused kernel: h = x_tile; for each layer l: h = act_l(h @ W_l + b_l); store.
# All layer weights/biases are resident (single-buffered) VMEM blocks held
# across the batch grid; intermediates stay on-core.
# ---------------------------------------------------------------------------
def _fused_mlp_kernel(alpha_ref, x_ref, *refs, acts):
    o_ref = refs[-1]        # (TB, Dout)   -- true output width (no lane pad)
    wb = refs[:-1]          # w0, b0, w1, b1, ...
    h = x_ref[...]          # (TB, Din) in the input dtype (f32 here)
    for i, act in enumerate(acts):
        w_ref = wb[2 * i]          # bf16 (K_i, N_i)
        b_ref = wb[2 * i + 1]      # f32  (1,  N_i)
        # bf16 x bf16 MXU matmul with f32 accumulation; bias/act stay in f32.
        y = jnp.dot(h.astype(jnp.bfloat16), w_ref[...],
                    preferred_element_type=jnp.float32) + b_ref[...]
        if act == "prelu":
            a = alpha_ref[i]       # scalar slope from SMEM (nn.PReLU: 1 param)
            y = jnp.where(y >= 0, y, a * y)
        elif act == "sigmoid":
            y = jax.nn.sigmoid(y)
        elif act == "tanh":
            y = jnp.tanh(y)
        elif act == "softplus":
            y = jax.nn.softplus(y)
        elif act == "none":
            pass
        else:
            raise ValueError(f"unknown activation {act!r}")
        h = y
    o_ref[...] = h.astype(o_ref.dtype)


# ---------------------------------------------------------------------------
# DenseWrapper in JAX: parameter init (deterministic) + fused forward.
# ---------------------------------------------------------------------------
def init_dense_wrapper(key, params, last_activation="leaky"):
    """Build layer params matching DenseWrapper.__init__ shapes.

    Weights: xavier-normal with gain = calculate_gain('leaky_relu'); kept in
             f32 unpadded [in, out] for reference, and in a kernel-side
             bf16 copy where
               * layer 0 keeps K = true Din (so x needs no lane pad),
               * the last layer keeps N = true Dout (narrow output store),
               * interior dims are zero-padded to multiples of 128.
    Biases:  uniform(-1/sqrt(fan_in), 1/sqrt(fan_in)) (PyTorch Linear default),
             kept in f32 (added after the f32 accumulation).
    PReLU:   single scalar alpha per layer, init 0.25 (PyTorch default),
             packed into one (num_layers,) f32 array for SMEM.
    """
    num_layers = len(params) - 1
    gain = math.sqrt(2.0 / (1.0 + 0.01 ** 2))   # calculate_gain('leaky_relu')
    layers = []
    for i in range(num_layers):
        fan_in, fan_out = params[i], params[i + 1]
        key, kw, kb = jax.random.split(key, 3)
        std = gain * math.sqrt(2.0 / (fan_in + fan_out))
        w = std * jax.random.normal(kw, (fan_in, fan_out), dtype=jnp.float32)
        bound = 1.0 / math.sqrt(fan_in)
        b = jax.random.uniform(kb, (1, fan_out), dtype=jnp.float32,
                               minval=-bound, maxval=bound)

        k_pad = fan_in if i == 0 else _round_up(fan_in, 128)
        n_pad = fan_out if i == num_layers - 1 else _round_up(fan_out, 128)
        w_p = jnp.zeros((k_pad, n_pad), jnp.float32).at[:fan_in, :fan_out].set(w)
        w_p = w_p.astype(jnp.bfloat16)          # bf16-native MXU on v5e/v6e/v7x
        b_p = jnp.zeros((1, n_pad), jnp.float32).at[:, :fan_out].set(b)

        if i < num_layers - 1:
            act = "prelu"
        else:
            act = {"leaky": "prelu", "sigmoid": "sigmoid",
                   "tanh": "tanh", "softplus": "softplus"}.get(
                       last_activation, "none")
        layers.append({"w": w, "b": b, "w_p": w_p, "b_p": b_p,
                       "act": act, "din": fan_in, "dout": fan_out})
    alphas = jnp.full((num_layers,), 0.25, dtype=jnp.float32)
    return {"layers": layers, "alphas": alphas}


def dense_wrapper_forward(x, model, *, batch_tile=1024):
    """Whole MLP as one pallas_call, tiled over the batch dimension."""
    layers = model["layers"]
    alphas = model["alphas"]
    acts = tuple(l["act"] for l in layers)

    B, Din = x.shape
    assert Din == layers[0]["din"]
    Dout = layers[-1]["dout"]

    # Balanced batch tiles (multiples of 16 for bf16 sublane packing).
    # Keep an even step count when >1 so both v7x TensorCores get work, and
    # avoid the up-to-(TB-1)-row waste of round_up(B, batch_tile).
    num_tiles = pl.cdiv(B, batch_tile)
    if B >= 256:
        num_tiles = max(num_tiles, 2)
    if num_tiles > 1 and num_tiles % 2:
        num_tiles += 1
    TB = _round_up(pl.cdiv(B, num_tiles), 16)
    grid_b = pl.cdiv(B, TB)
    B_pad = grid_b * TB

    # Only the batch axis is padded (no lane pad of x; layer-0 K = true Din).
    x_p = x if B_pad == B else jnp.pad(x, ((0, B_pad - B), (0, 0)))

    wb_inputs = []
    in_specs = [
        # PReLU alphas: whole (num_layers,) f32 array on the scalar path.
        pl.BlockSpec(memory_space=pltpu.MemorySpace.SMEM),
        # Activation tile: marches over the batch; last dim == full Din.
        pl.BlockSpec((TB, Din), lambda i: (i, 0)),
    ]
    for l in layers:
        wb_inputs += [l["w_p"], l["b_p"]]
        # Weights/biases resident across all batch tiles (constant block
        # index); single-buffered -> no VMEM wasted double-buffering a block
        # that never changes (matters on v7x's 64 MiB/TC).
        in_specs.append(pl.BlockSpec(l["w_p"].shape, lambda i: (0, 0),
                                     pipeline_mode=pl.Buffered(1)))
        in_specs.append(pl.BlockSpec(l["b_p"].shape, lambda i: (0, 0),
                                     pipeline_mode=pl.Buffered(1)))

    # Explicit VMEM budget: single-buffered weights + double-buffered
    # input/output tiles + f32 intermediate-activation headroom.
    itemsize = jnp.dtype(x.dtype).itemsize
    w_bytes = sum(int(l["w_p"].size) * l["w_p"].dtype.itemsize
                  + int(l["b_p"].size) * l["b_p"].dtype.itemsize
                  for l in layers)
    widest_n = max(int(l["w_p"].shape[1]) for l in layers)
    io_bytes = 2 * TB * Din * itemsize + 2 * TB * Dout * itemsize
    act_bytes = 2 * TB * widest_n * 4
    vmem_limit = min(max(w_bytes + io_bytes + act_bytes + (4 << 20), 32 << 20),
                     112 << 20)
    # TODO(synk): if w_bytes alone approaches v7x's 64 MiB/TC, fall back to
    # tiling the largest layer over N (or K with an accumulator + 'arbitrary'
    # grid axis) instead of keeping every weight resident.

    out_p = pl.pallas_call(
        functools.partial(_fused_mlp_kernel, acts=acts),
        out_shape=jax.ShapeDtypeStruct((B_pad, Dout), x.dtype),
        grid=(grid_b,),
        in_specs=in_specs,
        out_specs=pl.BlockSpec((TB, Dout), lambda i: (i, 0)),
        compiler_params=pltpu.CompilerParams(
            dimension_semantics=("parallel",),   # megacore-shardable batch axis
            vmem_limit_bytes=int(vmem_limit),
        ),
    )(alphas, x_p, *wb_inputs)

    return out_p if B_pad == B else out_p[:B]


# TODO(synk): enable_batch_norm / dropout / spectral_norm branches of
# DenseWrapper.__init__ (training-time options) and apply_heterogeneous_weights
# (per-sample bmm path) are not implemented here; default forward only.


if __name__ == "__main__":
    # Small shapes consistent with the module: an MLP over [batch, features].
    params = [32, 64, 48, 16]   # => 3 Linear layers, PReLU after each (default)
    batch = 8

    key = jax.random.PRNGKey(0)
    key, kx = jax.random.split(key)
    x = jax.random.normal(kx, (batch, params[0]), dtype=jnp.float32)

    model = init_dense_wrapper(key, params, last_activation="leaky")

    fwd = jax.jit(lambda xx: dense_wrapper_forward(xx, model))
    y = jax.block_until_ready(fwd(x))

    # Pure-JAX reference matching the kernel numerics: bf16 matmul inputs,
    # f32 accumulation, f32 bias-add / PReLU.
    ref = x
    for lyr, a in zip(model["layers"], list(model["alphas"])):
        hb = ref.astype(jnp.bfloat16).astype(jnp.float32)
        wb = lyr["w"].astype(jnp.bfloat16).astype(jnp.float32)
        ref = hb @ wb + lyr["b"]
        if lyr["act"] == "prelu":
            ref = jnp.where(ref >= 0, ref, a * ref)

    assert y.shape == (batch, params[-1])
    err = float(jnp.max(jnp.abs(y - ref)))
    assert err < 5e-3, f"max abs error {err}"
    print("KERNEL_OK")
</pallas_src>

<mosaic_0001>
module attributes {stable_mosaic.version = 11 : i64} {
  func.func @_fused_mlp_kernel(%arg0: i32, %arg1: memref<3xf32, #tpu.memory_space<smem>>, %arg2: memref<16x32xf32, #tpu.memory_space<vmem>>, %arg3: memref<32x128xbf16, #tpu.memory_space<vmem>>, %arg4: memref<1x128xf32, #tpu.memory_space<vmem>>, %arg5: memref<128x128xbf16, #tpu.memory_space<vmem>>, %arg6: memref<1x128xf32, #tpu.memory_space<vmem>>, %arg7: memref<128x16xbf16, #tpu.memory_space<vmem>>, %arg8: memref<1x16xf32, #tpu.memory_space<vmem>>, %arg9: memref<16x16xf32, #tpu.memory_space<vmem>>) attributes {dimension_semantics = [#tpu.dimension_semantics<parallel>], iteration_bounds = array<i64: 1>, scalar_prefetch = 0 : i64, scratch_operands = 0 : i64, tpu.core_type = #tpu.core_type<tc>, window_params = [{transform_indices = @transform_0, window_bounds = array<i64: 3>}, {transform_indices = @transform_1, window_bounds = array<i64: 16, 32>}, {pipeline_mode = #tpu.pipeline_mode<synchronous>, transform_indices = @transform_2, window_bounds = array<i64: 32, 128>}, {pipeline_mode = #tpu.pipeline_mode<synchronous>, transform_indices = @transform_3, window_bounds = array<i64: 1, 128>}, {pipeline_mode = #tpu.pipeline_mode<synchronous>, transform_indices = @transform_4, window_bounds = array<i64: 128, 128>}, {pipeline_mode = #tpu.pipeline_mode<synchronous>, transform_indices = @transform_5, window_bounds = array<i64: 1, 128>}, {pipeline_mode = #tpu.pipeline_mode<synchronous>, transform_indices = @transform_6, window_bounds = array<i64: 128, 16>}, {pipeline_mode = #tpu.pipeline_mode<synchronous>, transform_indices = @transform_7, window_bounds = array<i64: 1, 16>}, {transform_indices = @transform_8, window_bounds = array<i64: 16, 16>}]} {
    %c0 = arith.constant 0 : index
    %c0_0 = arith.constant 0 : index
    %0 = vector.load %arg2[%c0, %c0_0] : memref<16x32xf32, #tpu.memory_space<vmem>>, vector<16x32xf32>
    %1 = arith.truncf %0 : vector<16x32xf32> to vector<16x32xbf16>
    %c0_1 = arith.constant 0 : index
    %c0_2 = arith.constant 0 : index
    %2 = vector.load %arg3[%c0_1, %c0_2] : memref<32x128xbf16, #tpu.memory_space<vmem>>, vector<32x128xbf16>
    %cst = arith.constant dense<0.000000e+00> : vector<16x128xf32>
    %3 = tpu.matmul %1, %2, %cst {dimension_numbers = #tpu.dot_dimension_numbers<[1], [0], [0], [1], [0, 0, 1, 1], [], []>} : vector<16x32xbf16>, vector<32x128xbf16>, vector<16x128xf32> -> vector<16x128xf32>
    %c0_3 = arith.constant 0 : index
    %c0_4 = arith.constant 0 : index
    %4 = vector.load %arg4[%c0_3, %c0_4] : memref<1x128xf32, #tpu.memory_space<vmem>>, vector<1x128xf32>
    %5 = vector.broadcast %4 : vector<1x128xf32> to vector<16x128xf32>
    %6 = arith.addf %3, %5 : vector<16x128xf32>
    %c0_5 = arith.constant 0 : index
    %7 = memref.load %arg1[%c0_5] : memref<3xf32, #tpu.memory_space<smem>>
    %cst_6 = arith.constant 0.000000e+00 : f32
    %8 = vector.broadcast %cst_6 : f32 to vector<16x128xf32>
    %9 = arith.cmpf oge, %6, %8 : vector<16x128xf32>
    %10 = vector.broadcast %7 : f32 to vector<16x128xf32>
    %11 = arith.mulf %10, %6 : vector<16x128xf32>
    %12 = arith.select %9, %6, %11 : vector<16x128xi1>, vector<16x128xf32>
    %13 = arith.truncf %12 : vector<16x128xf32> to vector<16x128xbf16>
    %c0_7 = arith.constant 0 : index
    %c0_8 = arith.constant 0 : index
    %14 = vector.load %arg5[%c0_7, %c0_8] : memref<128x128xbf16, #tpu.memory_space<vmem>>, vector<128x128xbf16>
    %cst_9 = arith.constant dense<0.000000e+00> : vector<16x128xf32>
    %15 = tpu.matmul %13, %14, %cst_9 {dimension_numbers = #tpu.dot_dimension_numbers<[1], [0], [0], [1], [0, 0, 1, 1], [], []>} : vector<16x128xbf16>, vector<128x128xbf16>, vector<16x128xf32> -> vector<16x128xf32>
    %c0_10 = arith.constant 0 : index
    %c0_11 = arith.constant 0 : index
    %16 = vector.load %arg6[%c0_10, %c0_11] : memref<1x128xf32, #tpu.memory_space<vmem>>, vector<1x128xf32>
    %17 = vector.broadcast %16 : vector<1x128xf32> to vector<16x128xf32>
    %18 = arith.addf %15, %17 : vector<16x128xf32>
    %c1 = arith.constant 1 : index
    %19 = memref.load %arg1[%c1] : memref<3xf32, #tpu.memory_space<smem>>
    %cst_12 = arith.constant 0.000000e+00 : f32
    %20 = vector.broadcast %cst_12 : f32 to vector<16x128xf32>
    %21 = arith.cmpf oge, %18, %20 : vector<16x128xf32>
    %22 = vector.broadcast %19 : f32 to vector<16x128xf32>
    %23 = arith.mulf %22, %18 : vector<16x128xf32>
    %24 = arith.select %21, %18, %23 : vector<16x128xi1>, vector<16x128xf32>
    %25 = arith.truncf %24 : vector<16x128xf32> to vector<16x128xbf16>
    %c0_13 = arith.constant 0 : index
    %c0_14 = arith.constant 0 : index
    %26 = vector.load %arg7[%c0_13, %c0_14] : memref<128x16xbf16, #tpu.memory_space<vmem>>, vector<128x16xbf16>
    %cst_15 = arith.constant dense<0.000000e+00> : vector<16x16xf32>
    %27 = tpu.matmul %25, %26, %cst_15 {dimension_numbers = #tpu.dot_dimension_numbers<[1], [0], [0], [1], [0, 0, 1, 1], [], []>} : vector<16x128xbf16>, vector<128x16xbf16>, vector<16x16xf32> -> vector<16x16xf32>
    %c0_16 = arith.constant 0 : index
    %c0_17 = arith.constant 0 : index
    %28 = vector.load %arg8[%c0_16, %c0_17] : memref<1x16xf32, #tpu.memory_space<vmem>>, vector<1x16xf32>
    %29 = vector.broadcast %28 : vector<1x16xf32> to vector<16x16xf32>
    %30 = arith.addf %27, %29 : vector<16x16xf32>
    %c2 = arith.constant 2 : index
    %31 = memref.load %arg1[%c2] : memref<3xf32, #tpu.memory_space<smem>>
    %cst_18 = arith.constant 0.000000e+00 : f32
    %32 = vector.broadcast %cst_18 : f32 to vector<16x16xf32>
    %33 = arith.cmpf oge, %30, %32 : vector<16x16xf32>
    %34 = vector.broadcast %31 : f32 to vector<16x16xf32>
    %35 = arith.mulf %34, %30 : vector<16x16xf32>
    %36 = arith.select %33, %30, %35 : vector<16x16xi1>, vector<16x16xf32>
    %c0_19 = arith.constant 0 : index
    %c0_20 = arith.constant 0 : index
    %37 = vector.load %arg9[%c0_19, %c0_20] : memref<16x16xf32, #tpu.memory_space<vmem>>, vector<16x16xf32>
    tpu.vector_store %arg9[%c0_19, %c0_20], %36 {strides = array<i32>} : memref<16x16xf32, #tpu.memory_space<vmem>>, vector<16x16xf32>,
    return
  }
  func.func @transform_0(%arg0: i32) -> i32 {
    %c0_i32 = arith.constant 0 : i32
    %c0_i32_0 = arith.constant 0 : i32
    return %c0_i32 : i32
  }
  func.func @transform_1(%arg0: i32) -> (i32, i32) {
    %c0_i32 = arith.constant 0 : i32
    %c0_i32_0 = arith.constant 0 : i32
    return %arg0, %c0_i32 : i32, i32
  }
  func.func @transform_2(%arg0: i32) -> (i32, i32) {
    %c0_i32 = arith.constant 0 : i32
    %c0_i32_0 = arith.constant 0 : i32
    %c0_i32_1 = arith.constant 0 : i32
    return %c0_i32, %c0_i32_0 : i32, i32
  }
  func.func @transform_3(%arg0: i32) -> (i32, i32) {
    %c0_i32 = arith.constant 0 : i32
    %c0_i32_0 = arith.constant 0 : i32
    %c0_i32_1 = arith.constant 0 : i32
    return %c0_i32, %c0_i32_0 : i32, i32
  }
  func.func @transform_4(%arg0: i32) -> (i32, i32) {
    %c0_i32 = arith.constant 0 : i32
    %c0_i32_0 = arith.constant 0 : i32
    %c0_i32_1 = arith.constant 0 : i32
    return %c0_i32, %c0_i32_0 : i32, i32
  }
  func.func @transform_5(%arg0: i32) -> (i32, i32) {
    %c0_i32 = arith.constant 0 : i32
    %c0_i32_0 = arith.constant 0 : i32
    %c0_i32_1 = arith.constant 0 : i32
    return %c0_i32, %c0_i32_0 : i32, i32
  }
  func.func @transform_6(%arg0: i32) -> (i32, i32) {
    %c0_i32 = arith.constant 0 : i32
    %c0_i32_0 = arith.constant 0 : i32
    %c0_i32_1 = arith.constant 0 : i32
    return %c0_i32, %c0_i32_0 : i32, i32
  }
  func.func @transform_7(%arg0: i32) -> (i32, i32) {
    %c0_i32 = arith.constant 0 : i32
    %c0_i32_0 = arith.constant 0 : i32
    %c0_i32_1 = arith.constant 0 : i32
    return %c0_i32, %c0_i32_0 : i32, i32
  }
  func.func @transform_8(%arg0: i32) -> (i32, i32) {
    %c0_i32 = arith.constant 0 : i32
    %c0_i32_0 = arith.constant 0 : i32
    return %arg0, %c0_i32 : i32, i32
  }
}

</mosaic_0001>

<llo_original>
// kernel: _lambda_.1
$region0: #{_lambda_.1}
  #allocation0 [shape = 'u32[]', space=smem, size = 0x4, offset = 0x4, fixed_abs, tag = 'smem constant byte address 0x4 - core index']
  #allocation1 [shape = 'u32[144,128]{1,0:T(1,128)}', space=vmem, size = 0x12000, scoped, tag = 'internal scratch']
  %s0 = inlined_call_operand.vmem [shape: f32[3], index: 0, kind: input, shape index: {}]
  %s1 = inlined_call_operand.vmem [shape: f32[16,32], index: 1, kind: input, shape index: {}]
  %s2 = inlined_call_operand.hbm [shape: bf16[32,128], index: 2, kind: input, shape index: {}]
  %s3 = inlined_call_operand.vmem [shape: f32[1,128], index: 3, kind: input, shape index: {}]
  %s4 = inlined_call_operand.hbm [shape: bf16[128,128], index: 4, kind: input, shape index: {}]
  %s5 = inlined_call_operand.vmem [shape: f32[1,128], index: 5, kind: input, shape index: {}]
  %s6 = inlined_call_operand.vmem [shape: bf16[128,16], index: 6, kind: input, shape index: {}]
  %s7 = inlined_call_operand.vmem [shape: f32[1,16], index: 7, kind: input, shape index: {}]
  %s8 = inlined_call_operand.vmem [shape: f32[16,16], index: 8, kind: output, shape index: {}]
  %s9 = sld [smem:[#allocation0]]
  $region54: #{_lambda_.1} parent=0
    _
  %s11 = ssub.s32 1, %s9
  %s12 = scalar_select 0, %s11, %s9
  $region1: #{_lambda_.1} parent=0
    #allocation2 [shape = 'u8[512]{0}', space=smem, size = 0x200, scoped, tag = 'input window, operand 0, single buffered']
    #allocation3 [shape = 's32[1]{0}', space=sflag, size = 0x4, scoped, tag = 'scoped memory for _lambda_.1']
    #allocation4 [shape = 's32[1]{0}', space=sflag, size = 0x4, scoped, tag = 'scoped memory for _lambda_.1']
    #allocation5 [shape = 'u8[8192]{0}', space=vmem, size = 0x2000, scoped, tag = 'input window, operand 2, single buffered']
    #allocation6 [shape = 'u8[32768]{0}', space=vmem, size = 0x8000, scoped, tag = 'input window, operand 4, single buffered']
    #allocation7 [shape = 's32[1]{0}', space=sflag, size = 0x4, scoped, tag = 'scoped memory for _lambda_.1']
    %13 = vsyncpa [#allocation4], 0
    %14 = vsyncpa [#allocation3], 0
    %15 = vsyncpa [#allocation7], 0
    // Predicated region
    $region2: #{_lambda_.1} parent=1 // pred_check
      _
    $region3: #{_lambda_.1} parent=1 // pred_check_branch
      %17 = sbr.rel (0) target = $region5
    $region4: #{_lambda_.1} parent=1 // pred_region
      %s19 = ssub.s32 16, 16
      %20 = vsyncadd [#allocation4], %s19
      %s22 = sshll.u32 %s0, 4
      %s23 = int_to_ptr.vmem [resolvable:$true] %s22
      %25 = dma.vmem_to_smem %s23, 16, [#allocation2], [#allocation4]
    $region5: #{_lambda_.1} parent=1 // pred_fallthru
      _
    // Predicated region
    $region6: #{_lambda_.1} parent=1 // pred_check
      _
    $region7: #{_lambda_.1} parent=1 // pred_check_branch
      %27 = sbr.rel (0) target = $region9
    $region8: #{_lambda_.1} parent=1 // pred_region
      _
    $region9: #{_lambda_.1} parent=1 // pred_fallthru
      _
    // Predicated region
    $region10: #{_lambda_.1} parent=1 // pred_check
      _
    $region11: #{_lambda_.1} parent=1 // pred_check_branch
      %29 = sbr.rel (0) target = $region13
    $region12: #{_lambda_.1} parent=1 // pred_region
      %s31 = ssub.s32 256, 256
      %32 = vsyncadd [#allocation3], %s31
      %s33 = sshll.u32 [#allocation5], 4
      %s34 = int_to_ptr.vmem [resolvable:$true] %s33
      %39 = dma.hbm_to_vmem [thread:$0]  %s2, 256, %s34, [#allocation3], 64, 64, 4
    $region13: #{_lambda_.1} parent=1 // pred_fallthru
      _
    // Predicated region
    $region14: #{_lambda_.1} parent=1 // pred_check
      _
    $region15: #{_lambda_.1} parent=1 // pred_check_branch
      %41 = sbr.rel (0) target = $region17
    $region16: #{_lambda_.1} parent=1 // pred_region
      _
    $region17: #{_lambda_.1} parent=1 // pred_fallthru
      _
    // Predicated region
    $region18: #{_lambda_.1} parent=1 // pred_check
      _
    $region19: #{_lambda_.1} parent=1 // pred_check_branch
      %43 = sbr.rel (0) target = $region21
    $region20: #{_lambda_.1} parent=1 // pred_region
      %s45 = ssub.s32 1024, 1024
      %46 = vsyncadd [#allocation7], %s45
      %s47 = sshll.u32 [#allocation6], 4
      %s48 = int_to_ptr.vmem [resolvable:$true] %s47
      %53 = dma.hbm_to_vmem [thread:$0]  %s4, 1024, %s48, [#allocation7], 64, 64, 4
    $region21: #{_lambda_.1} parent=1 // pred_fallthru
      _
    // Predicated region
    $region22: #{_lambda_.1} parent=1 // pred_check
      _
    $region23: #{_lambda_.1} parent=1 // pred_check_branch
      %55 = sbr.rel (0) target = $region25
    $region24: #{_lambda_.1} parent=1 // pred_region
      _
    $region25: #{_lambda_.1} parent=1 // pred_fallthru
      _
    // Predicated region
    $region26: #{_lambda_.1} parent=1 // pred_check
      _
    $region27: #{_lambda_.1} parent=1 // pred_check_branch
      %57 = sbr.rel (0) target = $region29
    $region28: #{_lambda_.1} parent=1 // pred_region
      _
    $region29: #{_lambda_.1} parent=1 // pred_fallthru
      _
    // Predicated region
    $region30: #{_lambda_.1} parent=1 // pred_check
      _
    $region31: #{_lambda_.1} parent=1 // pred_check_branch
      %59 = sbr.rel (0) target = $region33
    $region32: #{_lambda_.1} parent=1 // pred_region
      _
    $region33: #{_lambda_.1} parent=1 // pred_fallthru
      _
    // Predicated region
    $region34: #{_lambda_.1} parent=1 // pred_check
      _
    $region35: #{_lambda_.1} parent=1 // pred_check_branch
      %61 = sbr.rel (0) target = $region37
    $region36: #{_lambda_.1} parent=1 // pred_region
      %62 = dma.done [#allocation4], 16
    $region37: #{_lambda_.1} parent=1 // pred_fallthru
      _
    // Predicated region
    $region38: #{_lambda_.1} parent=1 // pred_check
      _
    $region39: #{_lambda_.1} parent=1 // pred_check_branch
      %64 = sbr.rel (0) target = $region41
    $region40: #{_lambda_.1} parent=1 // pred_region
      %65 = dma.done [#allocation3], 256
    $region41: #{_lambda_.1} parent=1 // pred_fallthru
      _
    // Predicated region
    $region42: #{_lambda_.1} parent=1 // pred_check
      _
    $region43: #{_lambda_.1} parent=1 // pred_check_branch
      %67 = sbr.rel (0) target = $region45
    $region44: #{_lambda_.1} parent=1 // pred_region
      %68 = dma.done [#allocation7], 1024
    $region45: #{_lambda_.1} parent=1 // pred_fallthru
      _
    %69 = sfence
    %v71 = vld [vmem:[%s1] sm:$0xff]
    %v72 = vld [vmem:[%s1 + $0x8] sm:$0xff]
    %v73 = vpack.c.bf16 %v72, %v71
    %v74 = vld [vmem:[#allocation5] sm:$0xf]
    %v75 = vld [vmem:[#allocation5 + $0x4] sm:$0xf]
    %v76 = vld [vmem:[#allocation5 + $0x8] sm:$0xf]
    %v77 = vld [vmem:[#allocation5 + $0xc] sm:$0xf]
    %v78 = vld [vmem:[%s3] sm:$0x1]
    %v80 = vlaneseq
    %v81 = vshrl.u32 %v80, 7
    %v82 = vsub.s32 0, %v81
    %v83 = vrot.slane %v78, %v82
    %v89 = vunpack.c.l.b16 %v74
    %v90 = vunpack.c.l.b16 %v75
    %v91 = vunpack.c.l.b16 %v76
    %v92 = vunpack.c.l.b16 %v77
    %v93 = vpack.c.b16 %v90, %v89
    %v94 = vpack.c.b16 %v92, %v91
    %vm97 = vcmask 261120
    %v99 = vsel %vm97, %v73, 0
    %101 = vmatprep.subr.bf16.mxu0 0
    %102 = vmatpush1.bf16.msra.mxu0 %v93
    %103 = vmatprep.subr.bf16.mxu0 0
    %104 = vmatpush1.bf16.msra.mxu0 %v94
    %105 = vmatprep.subr.bf16.mxu0 0
    %106 = vmatpush1.bf16.msra.mxu0 0
    %107 = vmatprep.subr.bf16.mxu0 0
    %108 = vmatpush1.bf16.msra.mxu0 0
    %109 = vmatprep.subr.bf16.mxu0 0
    %110 = vmatpush1.bf16.msra.mxu0 0
    %111 = vmatprep.subr.bf16.mxu0 0
    %112 = vmatpush1.bf16.msra.mxu0 0
    %113 = vmatprep.subr.bf16.mxu0 0
    %114 = vmatpush1.bf16.msra.mxu0 0
    %115 = vmatprep.subr.bf16.mxu0 0
    %116 = vmatpush1.bf16.msra.mxu0 0
    %117 = vmatprep.subr.bf16.mxu0 0
    %118 = vmatpush1.bf16.msra.mxu0 0
    %119 = vmatprep.subr.bf16.mxu0 0
    %120 = vmatpush1.bf16.msra.mxu0 0
    %121 = vmatprep.subr.bf16.mxu0 0
    %122 = vmatpush1.bf16.msra.mxu0 0
    %123 = vmatprep.subr.bf16.mxu0 0
    %124 = vmatpush1.bf16.msra.mxu0 0
    %125 = vmatprep.subr.bf16.mxu0 0
    %126 = vmatpush1.bf16.msra.mxu0 0
    %127 = vmatprep.subr.bf16.mxu0 0
    %128 = vmatpush1.bf16.msra.mxu0 0
    %129 = vmatprep.subr.bf16.mxu0 0
    %130 = vmatpush1.bf16.msra.mxu0 0
    %131 = vmatprep.subr.bf16.mxu0 0
    %132 = vmatpush1.bf16.msra.mxu0 0
    %133 = vmatprep.mubr.bf16.mxu0 0
    %134 = vmatmul.mubr.bf16.gmra.mrb[0].mxu0 %v99
    %v135 = vpop.f32.mrb[0].mxu0
    %v136 = vadd.f32 %v83, %v135
    %v137 = vpop.f32.mrb[0].mxu0
    %v138 = vpop.f32.mrb[0].mxu0
    %v139 = vadd.f32 %v83, %v138
    %v140 = vpop.f32.mrb[0].mxu0
    %141 = vdwg.mxu0
    %s142 = sld [smem:[#allocation2]]
    %vm143 = vcmp.ge.f32.partialorder %v136, 0.0
    %vm144 = vcmp.ge.f32.partialorder %v139, 0.0
    %v145 = vstv %s142
    %v146 = vmul.f32 %v145, %v136
    %v147 = vmul.f32 %v145, %v139
    %v148 = vsel %vm143, %v136, %v146
    %v149 = vsel %vm144, %v139, %v147
    %v150 = vpack.c.bf16 %v149, %v148
    %v151 = vld [vmem:[#allocation6] sm:$0xf]
    %v152 = vld [vmem:[#allocation6 + $0x4] sm:$0xf]
    %v153 = vld [vmem:[#allocation6 + $0x8] sm:$0xf]
    %v154 = vld [vmem:[#allocation6 + $0xc] sm:$0xf]
    %v155 = vld [vmem:[#allocation6 + $0x10] sm:$0xf]
    %v156 = vld [vmem:[#allocation6 + $0x14] sm:$0xf]
    %v157 = vld [vmem:[#allocation6 + $0x18] sm:$0xf]
    %v158 = vld [vmem:[#allocation6 + $0x1c] sm:$0xf]
    %v159 = vld [vmem:[#allocation6 + $0x20] sm:$0xf]
    %v160 = vld [vmem:[#allocation6 + $0x24] sm:$0xf]
    %v161 = vld [vmem:[#allocation6 + $0x28] sm:$0xf]
    %v162 = vld [vmem:[#allocation6 + $0x2c] sm:$0xf]
    %v163 = vld [vmem:[#allocation6 + $0x30] sm:$0xf]
    %v164 = vld [vmem:[#allocation6 + $0x34] sm:$0xf]
    %v165 = vld [vmem:[#allocation6 + $0x38] sm:$0xf]
    %v166 = vld [vmem:[#allocation6 + $0x3c] sm:$0xf]
    %v167 = vld [vmem:[%s5] sm:$0x1]
    %v169 = vlaneseq
    %v170 = vshrl.u32 %v169, 7
    %v171 = vsub.s32 0, %v170
    %v172 = vrot.slane %v167, %v171
    %v190 = vunpack.c.l.b16 %v151
    %v191 = vunpack.c.l.b16 %v152
    %v192 = vunpack.c.l.b16 %v153
    %v193 = vunpack.c.l.b16 %v154
    %v194 = vunpack.c.l.b16 %v155
    %v195 = vunpack.c.l.b16 %v156
    %v196 = vunpack.c.l.b16 %v157
    %v197 = vunpack.c.l.b16 %v158
    %v198 = vunpack.c.l.b16 %v159
    %v199 = vunpack.c.l.b16 %v160
    %v200 = vunpack.c.l.b16 %v161
    %v201 = vunpack.c.l.b16 %v162
    %v202 = vunpack.c.l.b16 %v163
    %v203 = vunpack.c.l.b16 %v164
    %v204 = vunpack.c.l.b16 %v165
    %v205 = vunpack.c.l.b16 %v166
    %v206 = vpack.c.b16 %v191, %v190
    %v207 = vpack.c.b16 %v193, %v192
    %v208 = vpack.c.b16 %v195, %v194
    %v209 = vpack.c.b16 %v197, %v196
    %v210 = vpack.c.b16 %v199, %v198
    %v211 = vpack.c.b16 %v201, %v200
    %v212 = vpack.c.b16 %v203, %v202
    %v213 = vpack.c.b16 %v205, %v204
    %222 = vmatprep.subr.bf16.mxu0 0
    %223 = vmatpush1.bf16.msra.mxu0 %v206
    %224 = vmatprep.subr.bf16.mxu0 0
    %225 = vmatpush1.bf16.msra.mxu0 %v207
    %226 = vmatprep.subr.bf16.mxu0 0
    %227 = vmatpush1.bf16.msra.mxu0 %v208
    %228 = vmatprep.subr.bf16.mxu0 0
    %229 = vmatpush1.bf16.msra.mxu0 %v209
    %230 = vmatprep.subr.bf16.mxu0 0
    %231 = vmatpush1.bf16.msra.mxu0 %v210
    %232 = vmatprep.subr.bf16.mxu0 0
    %233 = vmatpush1.bf16.msra.mxu0 %v211
    %234 = vmatprep.subr.bf16.mxu0 0
    %235 = vmatpush1.bf16.msra.mxu0 %v212
    %236 = vmatprep.subr.bf16.mxu0 0
    %237 = vmatpush1.bf16.msra.mxu0 %v213
    %238 = vmatprep.subr.bf16.mxu0 0
    %239 = vmatpush1.bf16.msra.mxu0 0
    %240 = vmatprep.subr.bf16.mxu0 0
    %241 = vmatpush1.bf16.msra.mxu0 0
    %242 = vmatprep.subr.bf16.mxu0 0
    %243 = vmatpush1.bf16.msra.mxu0 0
    %244 = vmatprep.subr.bf16.mxu0 0
    %245 = vmatpush1.bf16.msra.mxu0 0
    %246 = vmatprep.subr.bf16.mxu0 0
    %247 = vmatpush1.bf16.msra.mxu0 0
    %248 = vmatprep.subr.bf16.mxu0 0
    %249 = vmatpush1.bf16.msra.mxu0 0
    %250 = vmatprep.subr.bf16.mxu0 0
    %251 = vmatpush1.bf16.msra.mxu0 0
    %252 = vmatprep.subr.bf16.mxu0 0
    %253 = vmatpush1.bf16.msra.mxu0 0
    %254 = vmatprep.mubr.bf16.mxu0 0
    %255 = vmatmul.mubr.bf16.gmra.mrb[0].mxu0 %v150
    %v256 = vpop.f32.mrb[0].mxu0
    %v257 = vadd.f32 %v172, %v256
    %v258 = vpop.f32.mrb[0].mxu0
    %v259 = vpop.f32.mrb[0].mxu0
    %v260 = vadd.f32 %v172, %v259
    %v261 = vpop.f32.mrb[0].mxu0
    %262 = vdwg.mxu0
    %s263 = sld [smem:[#allocation2 + $0x1]]
    %vm264 = vcmp.ge.f32.partialorder %v257, 0.0
    %vm265 = vcmp.ge.f32.partialorder %v260, 0.0
    %v266 = vstv %s263
    %v267 = vmul.f32 %v266, %v257
    %v268 = vmul.f32 %v266, %v260
    %v269 = vsel %vm264, %v257, %v267
    %v270 = vsel %vm265, %v260, %v268
    %v271 = vpack.c.bf16 %v270, %v269
    %v272 = vld [vmem:[%s6] sm:$0xf]
    %v273 = vld [vmem:[%s6 + $0x4] sm:$0xf]
    %v274 = vld [vmem:[%s6 + $0x8] sm:$0xf]
    %v275 = vld [vmem:[%s6 + $0xc] sm:$0xf]
    %v276 = vld [vmem:[%s6 + $0x10] sm:$0xf]
    %v277 = vld [vmem:[%s6 + $0x14] sm:$0xf]
    %v278 = vld [vmem:[%s6 + $0x18] sm:$0xf]
    %v279 = vld [vmem:[%s6 + $0x1c] sm:$0xf]
    %v280 = vld [vmem:[%s6 + $0x20] sm:$0xf]
    %v281 = vld [vmem:[%s6 + $0x24] sm:$0xf]
    %v282 = vld [vmem:[%s6 + $0x28] sm:$0xf]
    %v283 = vld [vmem:[%s6 + $0x2c] sm:$0xf]
    %v284 = vld [vmem:[%s6 + $0x30] sm:$0xf]
    %v285 = vld [vmem:[%s6 + $0x34] sm:$0xf]
    %v286 = vld [vmem:[%s6 + $0x38] sm:$0xf]
    %v287 = vld [vmem:[%s6 + $0x3c] sm:$0xf]
    %v288 = vld [vmem:[%s7] sm:$0x1]
    %v290 = vlaneseq
    %v291 = vshrl.u32 %v290, 7
    %v292 = vsub.s32 0, %v291
    %v293 = vrot.slane %v288, %v292
    %v311 = vunpack.c.l.b16 %v272
    %v312 = vunpack.c.l.b16 %v273
    %v313 = vunpack.c.l.b16 %v274
    %v314 = vunpack.c.l.b16 %v275
    %v315 = vunpack.c.l.b16 %v276
    %v316 = vunpack.c.l.b16 %v277
    %v317 = vunpack.c.l.b16 %v278
    %v318 = vunpack.c.l.b16 %v279
    %v319 = vunpack.c.l.b16 %v280
    %v320 = vunpack.c.l.b16 %v281
    %v321 = vunpack.c.l.b16 %v282
    %v322 = vunpack.c.l.b16 %v283
    %v323 = vunpack.c.l.b16 %v284
    %v324 = vunpack.c.l.b16 %v285
    %v325 = vunpack.c.l.b16 %v286
    %v326 = vunpack.c.l.b16 %v287
    %v327 = vpack.c.b16 %v312, %v311
    %v328 = vpack.c.b16 %v314, %v313
    %v329 = vpack.c.b16 %v316, %v315
    %v330 = vpack.c.b16 %v318, %v317
    %v331 = vpack.c.b16 %v320, %v319
    %v332 = vpack.c.b16 %v322, %v321
    %v333 = vpack.c.b16 %v324, %v323
    %v334 = vpack.c.b16 %v326, %v325
    %343 = vmatprep.subr.bf16.mxu0 0
    %344 = vmatpush1.bf16.msra.mxu0 %v327
    %345 = vmatprep.subr.bf16.mxu0 0
    %346 = vmatpush1.bf16.msra.mxu0 %v328
    %347 = vmatprep.subr.bf16.mxu0 0
    %348 = vmatpush1.bf16.msra.mxu0 %v329
    %349 = vmatprep.subr.bf16.mxu0 0
    %350 = vmatpush1.bf16.msra.mxu0 %v330
    %351 = vmatprep.subr.bf16.mxu0 0
    %352 = vmatpush1.bf16.msra.mxu0 %v331
    %353 = vmatprep.subr.bf16.mxu0 0
    %354 = vmatpush1.bf16.msra.mxu0 %v332
    %355 = vmatprep.subr.bf16.mxu0 0
    %356 = vmatpush1.bf16.msra.mxu0 %v333
    %357 = vmatprep.subr.bf16.mxu0 0
    %358 = vmatpush1.bf16.msra.mxu0 %v334
    %359 = vmatprep.subr.bf16.mxu0 0
    %360 = vmatpush1.bf16.msra.mxu0 0
    %361 = vmatprep.subr.bf16.mxu0 0
    %362 = vmatpush1.bf16.msra.mxu0 0
    %363 = vmatprep.subr.bf16.mxu0 0
    %364 = vmatpush1.bf16.msra.mxu0 0
    %365 = vmatprep.subr.bf16.mxu0 0
    %366 = vmatpush1.bf16.msra.mxu0 0
    %367 = vmatprep.subr.bf16.mxu0 0
    %368 = vmatpush1.bf16.msra.mxu0 0
    %369 = vmatprep.subr.bf16.mxu0 0
    %370 = vmatpush1.bf16.msra.mxu0 0
    %371 = vmatprep.subr.bf16.mxu0 0
    %372 = vmatpush1.bf16.msra.mxu0 0
    %373 = vmatprep.subr.bf16.mxu0 0
    %374 = vmatpush1.bf16.msra.mxu0 0
    %375 = vmatprep.mubr.bf16.mxu0 0
    %376 = vmatmul.mubr.bf16.gmra.mrb[0].mxu0 %v271
    %v377 = vpop.f32.mrb[0].mxu0
    %v378 = vadd.f32 %v293, %v377
    %v379 = vpop.f32.mrb[0].mxu0
    %v380 = vpop.f32.mrb[0].mxu0
    %v381 = vadd.f32 %v293, %v380
    %v382 = vpop.f32.mrb[0].mxu0
    %383 = vdwg.mxu0
    %s384 = sld [smem:[#allocation2 + $0x2]]
    %vm385 = vcmp.ge.f32.partialorder %v378, 0.0
    %vm386 = vcmp.ge.f32.partialorder %v381, 0.0
    %v387 = vstv %s384
    %v388 = vmul.f32 %v387, %v378
    %v389 = vmul.f32 %v387, %v381
    %v390 = vsel %vm385, %v378, %v388
    %v391 = vsel %vm386, %v381, %v389
    %vm392 = vcmask 130048
    %393 = vst.msk [vmem:[%s8] sm:$0xff] %vm392, %v390
    %394 = vst.msk [vmem:[%s8 + $0x8] sm:$0xff] %vm392, %v391
    // Predicated region
    $region46: #{_lambda_.1} parent=1 // pred_check
      _
    $region47: #{_lambda_.1} parent=1 // pred_check_branch
      %396 = sbr.rel (0) target = $region49
    $region48: #{_lambda_.1} parent=1 // pred_region
      _
    $region49: #{_lambda_.1} parent=1 // pred_fallthru
      _
    // Predicated region
    $region50: #{_lambda_.1} parent=1 // pred_check
      _
    $region51: #{_lambda_.1} parent=1 // pred_check_branch
      %398 = sbr.rel (0) target = $region53
    $region52: #{_lambda_.1} parent=1 // pred_region
      _
    $region53: #{_lambda_.1} parent=1 // pred_fallthru
      _
    %399 = vsyncpa [#allocation3], 1
    %400 = vsyncpa [#allocation7], 1
    %401 = vsyncpa [#allocation4], 1

</llo_original>
